<compile_context>
chip_gen: v5e
topology: v5e:2x2
jax: 0.10.0
libtpu: 0.0.40
codegen_flags: <defaults>
</compile_context>

<pallas_src>
import functools

import jax
import jax.numpy as jnp
from jax.experimental import pallas as pl
from jax.experimental.pallas import tpu as pltpu


def _round_up(x: int, m: int) -> int:
    return ((x + m - 1) // m) * m


def _gcn_fused_kernel(a_ref, x_ref, w_ref, o_ref, acc_ref, *, apply_relu: bool):
    """One (tm, out_dim) output tile of (A @ X) @ W^T, fused in a single pass.

    Grid axis 0: output-row blocks ("parallel").
    Grid axis 1: K blocks over A's columns / X's rows ("arbitrary", reduction).
    acc_ref holds the (tm, in_dim) partial aggregation A@X in f32; the
    node-apply linear (and optional fused ReLU) runs in the k==last epilogue.
    """
    @pl.when(pl.program_id(1) == 0)
    def _init():
        acc_ref[...] = jnp.zeros_like(acc_ref)

    # bf16 x bf16 -> f32 accumulation on the MXU.
    acc_ref[...] += jnp.dot(a_ref[...], x_ref[...],
                            preferred_element_type=jnp.float32)

    @pl.when(pl.program_id(1) == pl.num_programs(1) - 1)
    def _finalize():
        # (tm, in_dim) . (out_dim, in_dim)  contracting in_dim on both sides;
        # the MXU handles the transposed RHS natively (no materialized W^T).
        h = jax.lax.dot_general(
            acc_ref[...], w_ref[...],
            dimension_numbers=(((1,), (1,)), ((), ())),
            preferred_element_type=jnp.float32,
        )
        if apply_relu:
            h = jnp.maximum(h, 0.0)
        o_ref[...] = h.astype(o_ref.dtype)


def gcn_layer_forward(adj, features, weight, *, bias=None, activation=None,
                      tm_cap=512, tk_cap=512, out_dtype=None):
    """GCNLayer forward (default flags) on a dense adjacency.

    adj:      (N, N)        adj[dst, src] = edge weight (1.0 per edge).
    features: (N, in_dim)   node features.
    weight:   (out_dim, in_dim)  nn.Linear weight layout (bias optional).
    activation: None, "relu", jax.nn.relu, or any callable.
    """
    N_dst, N_src = adj.shape
    N_feat, in_dim = features.shape
    out_dim, in_dim_w = weight.shape
    assert N_src == N_feat, f"adjacency/feature node mismatch: {N_src} vs {N_feat}"
    assert in_dim == in_dim_w, f"feature/weight dim mismatch: {in_dim} vs {in_dim_w}"
    out_dtype = out_dtype or features.dtype

    # ---- lane-dense tiling: everything is a multiple of 128, no fallbacks ----
    rows128 = _round_up(N_dst, 128) // 128
    cols128 = _round_up(N_src, 128) // 128
    # Prefer >=2 row blocks (v7x megacore) while capping the tile size.
    if rows128 >= 2:
        tm = 128 * min(max(tm_cap // 128, 1), max(rows128 // 2, 1))
    else:
        tm = 128
    tk = 128 * min(max(tk_cap // 128, 1), cols128)
    Mp = _round_up(N_dst, tm)
    Kp = _round_up(N_src, tk)
    Dinp = _round_up(in_dim, 128)
    Doutp = _round_up(out_dim, 128)
    # TODO(synk): for very large in_dim the (tm, Dinp) accumulator / full-width
    # X tile should fall back to a tiled feature axis; fine for typical GCN dims.

    # Adjacency is exactly {0,1} -> lossless in bf16; features in bf16 halve HBM
    # traffic and hit the fast bf16 MXU path (f32 accumulation keeps the sums exact).
    compute_dtype = jnp.bfloat16
    a_p = jnp.pad(adj.astype(compute_dtype),
                  ((0, Mp - N_dst), (0, Kp - N_src)))
    x_p = jnp.pad(features.astype(compute_dtype),
                  ((0, Kp - N_feat), (0, Dinp - in_dim)))
    w_p = jnp.pad(weight.astype(jnp.float32),
                  ((0, Doutp - out_dim), (0, Dinp - in_dim)))

    fuse_relu = bias is None and (activation == "relu" or activation is jax.nn.relu)
    kernel = functools.partial(_gcn_fused_kernel, apply_relu=fuse_relu)

    grid = (Mp // tm, Kp // tk)
    h_p = pl.pallas_call(
        kernel,
        out_shape=jax.ShapeDtypeStruct((Mp, Doutp), out_dtype),
        grid=grid,
        in_specs=[
            pl.BlockSpec((tm, tk), lambda i, k: (i, k)),       # A tile
            pl.BlockSpec((tk, Dinp), lambda i, k: (k, 0)),     # X tile (full width)
            pl.BlockSpec((Doutp, Dinp), lambda i, k: (0, 0)),  # W, VMEM-resident
        ],
        out_specs=pl.BlockSpec((tm, Doutp), lambda i, k: (i, 0)),
        scratch_shapes=[pltpu.VMEM((tm, Dinp), jnp.float32)],
        compiler_params=pltpu.CompilerParams(
            dimension_semantics=("parallel", "arbitrary"),
            vmem_limit_bytes=40 * 1024 * 1024,
        ),
    )(a_p, x_p, w_p)

    h = h_p[:N_dst, :out_dim]

    if not fuse_relu:
        if bias is not None:                 # bias before activation (PyTorch order)
            h = h + bias
        if activation is not None:
            act = jax.nn.relu if activation == "relu" else activation
            h = act(h)

    # TODO(synk): graph_norm / batch_norm / pair_norm / residual(beta) / dropout /
    # dropedge / cutgraph are disabled in the default GCNLayer config and are not
    # implemented here.
    return h


if __name__ == "__main__":
    key = jax.random.PRNGKey(0)
    k_adj, k_x, k_w = jax.random.split(key, 3)

    # Small graph: 256 nodes, 128-dim features, 128-dim output (lane-dense dims).
    N, in_dim, out_dim = 256, 128, 128

    # Random sparse-ish adjacency (dst, src), ~8 in-neighbors per node, weight 1.0.
    adj = (jax.random.uniform(k_adj, (N, N)) < (8.0 / N)).astype(jnp.float32)
    x = jax.random.normal(k_x, (N, in_dim), dtype=jnp.float32)
    w = jax.random.normal(k_w, (out_dim, in_dim), dtype=jnp.float32) * (
        1.0 / jnp.sqrt(jnp.float32(in_dim))
    )

    h = gcn_layer_forward(adj, x, w)
    jax.block_until_ready(h)

    # Reference: the kernel streams X as bf16 (documented mixed-precision choice),
    # so compare against the f32-HIGHEST reference on the same bf16-rounded X
    # (adjacency is exactly representable in bf16, W stays f32 in the epilogue).
    x_bf = x.astype(jnp.bfloat16).astype(jnp.float32)
    ref = jax.lax.dot(
        jax.lax.dot(adj, x_bf, precision=jax.lax.Precision.HIGHEST),
        w.T,
        precision=jax.lax.Precision.HIGHEST,
    )

    assert h.shape == (N, out_dim)
    assert h.dtype == x.dtype
    err = float(jnp.max(jnp.abs(h - ref)))
    assert jnp.allclose(h, ref, rtol=5e-3, atol=5e-3), f"max abs err = {err}"

    print("KERNEL_OK")
</pallas_src>

<mosaic_0001>
module attributes {stable_mosaic.version = 11 : i64} {
  func.func @_gcn_fused_kernel(%arg0: i32, %arg1: i32, %arg2: memref<128x256xbf16, #tpu.memory_space<vmem>>, %arg3: memref<256x128xbf16, #tpu.memory_space<vmem>>, %arg4: memref<128x128xf32, #tpu.memory_space<vmem>>, %arg5: memref<128x128xf32, #tpu.memory_space<vmem>>, %arg6: memref<128x128xf32, #tpu.memory_space<vmem>>) attributes {dimension_semantics = [#tpu.dimension_semantics<parallel>, #tpu.dimension_semantics<arbitrary>], iteration_bounds = array<i64: 2, 1>, scalar_prefetch = 0 : i64, scratch_operands = 1 : i64, tpu.core_type = #tpu.core_type<tc>, window_params = [{transform_indices = @transform_0, window_bounds = array<i64: 128, 256>}, {transform_indices = @transform_1, window_bounds = array<i64: 256, 128>}, {pipeline_mode = #tpu.pipeline_mode<synchronous>, transform_indices = @transform_2, window_bounds = array<i64: 128, 128>}, {transform_indices = @transform_3, window_bounds = array<i64: 128, 128>}]} {
    %c0_i32 = arith.constant 0 : i32
    %0 = arith.cmpi eq, %arg1, %c0_i32 : i32
    %1 = arith.extui %0 : i1 to i32
    %c0_i32_0 = arith.constant 0 : i32
    %2 = arith.cmpi ne, %1, %c0_i32_0 : i32
    scf.if %2 {
      %cst_10 = arith.constant 0.000000e+00 : f32
      %12 = vector.broadcast %cst_10 : f32 to vector<128x128xf32>
      %c0_11 = arith.constant 0 : index
      %c0_12 = arith.constant 0 : index
      %13 = vector.load %arg6[%c0_11, %c0_12] : memref<128x128xf32, #tpu.memory_space<vmem>>, vector<128x128xf32>
      tpu.vector_store %arg6[%c0_11, %c0_12], %12 {strides = array<i32>} : memref<128x128xf32, #tpu.memory_space<vmem>>, vector<128x128xf32>,
    } else {
    }
    %c0 = arith.constant 0 : index
    %c0_1 = arith.constant 0 : index
    %3 = vector.load %arg6[%c0, %c0_1] : memref<128x128xf32, #tpu.memory_space<vmem>>, vector<128x128xf32>
    %c0_2 = arith.constant 0 : index
    %c0_3 = arith.constant 0 : index
    %4 = vector.load %arg2[%c0_2, %c0_3] : memref<128x256xbf16, #tpu.memory_space<vmem>>, vector<128x256xbf16>
    %c0_4 = arith.constant 0 : index
    %c0_5 = arith.constant 0 : index
    %5 = vector.load %arg3[%c0_4, %c0_5] : memref<256x128xbf16, #tpu.memory_space<vmem>>, vector<256x128xbf16>
    %cst = arith.constant dense<0.000000e+00> : vector<128x128xf32>
    %6 = tpu.matmul %4, %5, %cst {dimension_numbers = #tpu.dot_dimension_numbers<[1], [0], [0], [1], [0, 0, 1, 1], [], []>} : vector<128x256xbf16>, vector<256x128xbf16>, vector<128x128xf32> -> vector<128x128xf32>
    %7 = arith.addf %3, %6 : vector<128x128xf32>
    %c0_6 = arith.constant 0 : index
    %c0_7 = arith.constant 0 : index
    %8 = vector.load %arg6[%c0_6, %c0_7] : memref<128x128xf32, #tpu.memory_space<vmem>>, vector<128x128xf32>
    tpu.vector_store %arg6[%c0_6, %c0_7], %7 {strides = array<i32>} : memref<128x128xf32, #tpu.memory_space<vmem>>, vector<128x128xf32>,
    %c0_i32_8 = arith.constant 0 : i32
    %9 = arith.cmpi eq, %arg1, %c0_i32_8 : i32
    %10 = arith.extui %9 : i1 to i32
    %c0_i32_9 = arith.constant 0 : i32
    %11 = arith.cmpi ne, %10, %c0_i32_9 : i32
    scf.if %11 {
      %c0_10 = arith.constant 0 : index
      %c0_11 = arith.constant 0 : index
      %12 = vector.load %arg6[%c0_10, %c0_11] : memref<128x128xf32, #tpu.memory_space<vmem>>, vector<128x128xf32>
      %c0_12 = arith.constant 0 : index
      %c0_13 = arith.constant 0 : index
      %13 = vector.load %arg4[%c0_12, %c0_13] : memref<128x128xf32, #tpu.memory_space<vmem>>, vector<128x128xf32>
      %cst_14 = arith.constant dense<0.000000e+00> : vector<128x128xf32>
      %14 = tpu.matmul %12, %13, %cst_14 {dimension_numbers = #tpu.dot_dimension_numbers<[1], [1], [0], [0], [0, 0, 1, 0], [], []>} : vector<128x128xf32>, vector<128x128xf32>, vector<128x128xf32> -> vector<128x128xf32>
      %c0_15 = arith.constant 0 : index
      %c0_16 = arith.constant 0 : index
      %15 = vector.load %arg5[%c0_15, %c0_16] : memref<128x128xf32, #tpu.memory_space<vmem>>, vector<128x128xf32>
      tpu.vector_store %arg5[%c0_15, %c0_16], %14 {strides = array<i32>} : memref<128x128xf32, #tpu.memory_space<vmem>>, vector<128x128xf32>,
    } else {
    }
    return
  }
  func.func @transform_0(%arg0: i32, %arg1: i32) -> (i32, i32) {
    %c0_i32 = arith.constant 0 : i32
    return %arg0, %arg1 : i32, i32
  }
  func.func @transform_1(%arg0: i32, %arg1: i32) -> (i32, i32) {
    %c0_i32 = arith.constant 0 : i32
    %c0_i32_0 = arith.constant 0 : i32
    return %arg1, %c0_i32 : i32, i32
  }
  func.func @transform_2(%arg0: i32, %arg1: i32) -> (i32, i32) {
    %c0_i32 = arith.constant 0 : i32
    %c0_i32_0 = arith.constant 0 : i32
    %c0_i32_1 = arith.constant 0 : i32
    return %c0_i32, %c0_i32_0 : i32, i32
  }
  func.func @transform_3(%arg0: i32, %arg1: i32) -> (i32, i32) {
    %c0_i32 = arith.constant 0 : i32
    %c0_i32_0 = arith.constant 0 : i32
    return %arg0, %c0_i32 : i32, i32
  }
}

</mosaic_0001>

<llo_original>
// kernel: tpu_custom_call.1
$region0: #{tpu_custom_call.1}
  #allocation0 [shape = 'u32[]', space=smem, size = 0x4, offset = 0x4, fixed_abs, tag = 'smem constant byte address 0x4 - core index']
  #allocation1 [shape = 'u32[72,128]{1,0:T(1,128)}', space=vmem, size = 0x9000, scoped, tag = 'internal scratch']
  #allocation2 [shape = 'f32[128,128]{1,0:T(8,128)}', space=vmem, size = 0x10000, scoped, tag = 'scratch operand']
  %s0 = inlined_call_operand.hbm [shape: bf16[256,256], index: 0, kind: input, shape index: {}]
  %s1 = inlined_call_operand.hbm [shape: bf16[256,128], index: 1, kind: input, shape index: {}]
  %s2 = inlined_call_operand.hbm [shape: f32[128,128], index: 2, kind: input, shape index: {}]
  %s3 = inlined_call_operand.hbm [shape: f32[256,128], index: 3, kind: output, shape index: {}]
  %s4 = sld [smem:[#allocation0]]
  $region65: #{tpu_custom_call.1} parent=0
    _
  %s6 = ssub.s32 1, %s4
  %s7 = scalar_select 0, %s6, %s4
  $region1: #{tpu_custom_call.1} parent=0
    #allocation3 [shape = 'u8[131072]{0}', space=vmem, size = 0x20000, scoped, tag = 'input window, operand 0']
    #allocation4 [shape = 's32[2]{0}', space=sflag, size = 0x8, scoped, tag = 'scoped memory for tpu_custom_call.1']
    #allocation5 [shape = 's32[2]{0}', space=sflag, size = 0x8, scoped, tag = 'scoped memory for tpu_custom_call.1']
    #allocation6 [shape = 'u8[65536]{0}', space=vmem, size = 0x10000, scoped, tag = 'input window, operand 1, single buffered']
    #allocation7 [shape = 's32[1]{0}', space=sflag, size = 0x4, scoped, tag = 'scoped memory for tpu_custom_call.1']
    #allocation8 [shape = 'u8[65536]{0}', space=vmem, size = 0x10000, scoped, tag = 'input window, operand 2, single buffered']
    #allocation9 [shape = 'u8[131072]{0}', space=vmem, size = 0x20000, scoped, tag = 'output window, operand 0']
    %8 = vsyncpa [#allocation4], 0
    %s9 = scalar_lea.sflag [#allocation4], 1
    %10 = vsyncpa %s9, 0
    %11 = vsyncpa [#allocation7], 0
    %12 = vsyncpa [#allocation5], 0
    %s13 = scalar_lea.sflag [#allocation5], 1
    %14 = vsyncpa %s13, 0
    loop: start=0, step=1, limit=4
    $region2: #{tpu_custom_call.1} parent=1 // loop_pre_header
      _
    $region3: #{tpu_custom_call.1} parent=1 // loop_header
      %s16 = sphi 0, %s20
      %p17 = scmp.ge.s32.totalorder %s16, 4
      %s23 = sphi 0, %s35
      %s24 = sphi 0, %s31
      %s25 = sphi 0, %s23
      %s26 = sphi 0, %s24
      %s27 = sphi 0, %s25
      %s28 = sphi 0, %s26
      %s40 = sphi 0, %s42
      %s43 = sphi 0, %s40
      %s44 = sphi 0, %s43
      %s60 = sphi 0, %s44
      %s66 = sphi 0, %s68
      %s69 = sphi 0, %s66
      %s70 = sphi 0, %s69
      %s86 = sphi 0, %s70
      %s90 = sphi 0, %s90
      %s92 = sphi 0, %s90
      %s93 = sphi 0, %s92
      %s107 = sphi 0, %s93
      %s113 = sphi 0, %s115
      %s116 = sphi 0, %s113
      %s117 = sphi 0, %s116
      %s133 = sphi 0, %s117
    $region4: #{tpu_custom_call.1} parent=1 // loop_header_branch
      %19 = sbr.rel (%p17) target = $region8
    $region5: #{tpu_custom_call.1} parent=1 // loop_body
      %s21 = ssub.s32 %s16, 1
      %s22 = ssub.s32 %s16, 2
      %s29 = sadd.s32 1, %s24
      %p30 = scmp.ge.s32.totalorder %s29, 1
      %s31 = scalar_select %p30, 0, %s29
      %s32 = sadd.s32 1, %s23
      %s33 = scalar_select %p30, %s32, %s23
      %p34 = scmp.ge.s32.totalorder %s33, 2
      %s35 = scalar_select %p34, 0, %s33
      %s36 = ssub.s32 %s23, %s35
      %s37 = ssub.s32 %s24, %s31
      %s38 = sor.u32 %s36, %s37
      %p39 = scmp.eq.s32.totalorder %s38, 0
      %s41 = sadd.s32 %s40, 1
      %s42 = scalar_select %p39, %s40, %s41
      %p45 = pneg %p39
      %p46 = scmp.eq.s32.totalorder %s16, 1
      %p47 = por %p45, %p46
      %p48 = scmp.ne.s32.totalorder %s40, %s43
      %p49 = scmp.eq.s32.totalorder %s16, 0
      %p50 = por %p48, %p49
      %p51 = scmp.ne.s32.totalorder %s40, %s43
      %p52 = scmp.eq.s32.totalorder %s21, 1
      %p53 = por %p51, %p52
      %p54 = scmp.ne.s32.totalorder %s43, %s44
      %p55 = scmp.eq.s32.totalorder %s21, 0
      %p56 = por %p54, %p55
      %p57 = scmp.ne.s32.totalorder %s43, %s44
      %p58 = scmp.eq.s32.totalorder %s22, 1
      %p59 = por %p57, %p58
      %p61 = scmp.ne.s32.totalorder %s44, %s60
      %p62 = scmp.eq.s32.totalorder %s22, 0
      %p63 = por %p61, %p62
      %s64 = ssub.s32 %s24, %s31
      %p65 = scmp.eq.s32.totalorder %s64, 0
      %s67 = sadd.s32 %s66, 1
      %s68 = scalar_select %p65, %s66, %s67
      %p71 = pneg %p65
      %p72 = scmp.eq.s32.totalorder %s16, 1
      %p73 = por %p71, %p72
      %p74 = scmp.ne.s32.totalorder %s66, %s69
      %p75 = scmp.eq.s32.totalorder %s16, 0
      %p76 = por %p74, %p75
      %p77 = scmp.ne.s32.totalorder %s66, %s69
      %p78 = scmp.eq.s32.totalorder %s21, 1
      %p79 = por %p77, %p78
      %p80 = scmp.ne.s32.totalorder %s69, %s70
      %p81 = scmp.eq.s32.totalorder %s21, 0
      %p82 = por %p80, %p81
      %p83 = scmp.ne.s32.totalorder %s69, %s70
      %p84 = scmp.eq.s32.totalorder %s22, 1
      %p85 = por %p83, %p84
      %p87 = scmp.ne.s32.totalorder %s70, %s86
      %p88 = scmp.eq.s32.totalorder %s22, 0
      %p89 = por %p87, %p88
      %s91 = sadd.s32 %s90, 1
      %p94 = scmp.eq.s32.totalorder %s16, 1
      %p95 = scmp.ne.s32.totalorder %s90, %s92
      %p96 = scmp.eq.s32.totalorder %s16, 0
      %p97 = por %p95, %p96
      %p98 = scmp.ne.s32.totalorder %s90, %s92
      %p99 = scmp.eq.s32.totalorder %s21, 1
      %p100 = por %p98, %p99
      %p101 = scmp.ne.s32.totalorder %s92, %s93
      %p102 = scmp.eq.s32.totalorder %s21, 0
      %p103 = por %p101, %p102
      %p104 = scmp.ne.s32.totalorder %s92, %s93
      %p105 = scmp.eq.s32.totalorder %s22, 1
      %p106 = por %p104, %p105
      %p108 = scmp.ne.s32.totalorder %s93, %s107
      %p109 = scmp.eq.s32.totalorder %s22, 0
      %p110 = por %p108, %p109
      %s111 = ssub.s32 %s23, %s35
      %p112 = scmp.eq.s32.totalorder %s111, 0
      %s114 = sadd.s32 %s113, 1
      %s115 = scalar_select %p112, %s113, %s114
      %p118 = pneg %p112
      %p119 = scmp.eq.s32.totalorder %s16, 1
      %p120 = por %p118, %p119
      %p121 = scmp.ne.s32.totalorder %s113, %s116
      %p122 = scmp.eq.s32.totalorder %s16, 0
      %p123 = por %p121, %p122
      %p124 = scmp.ne.s32.totalorder %s113, %s116
      %p125 = scmp.eq.s32.totalorder %s21, 1
      %p126 = por %p124, %p125
      %p127 = scmp.ne.s32.totalorder %s116, %s117
      %p128 = scmp.eq.s32.totalorder %s21, 0
      %p129 = por %p127, %p128
      %p130 = scmp.ne.s32.totalorder %s116, %s117
      %p131 = scmp.eq.s32.totalorder %s22, 1
      %p132 = por %p130, %p131
      %p134 = scmp.ne.s32.totalorder %s117, %s133
      %p135 = scmp.eq.s32.totalorder %s22, 0
      %p136 = por %p134, %p135
      %p137 = scmp.le.s32.totalorder 1, %s16
      %p138 = scmp.lt.s32.totalorder %s16, 3
      %p139 = pnand %p137, %p138
      %p140 = pneg %p139
      // Predicated region
      $region9: #{tpu_custom_call.1} parent=5 // pred_check
        _
      $region10: #{tpu_custom_call.1} parent=5 // pred_check_branch
        %142 = sbr.rel (%p139) target = $region12
      $region11: #{tpu_custom_call.1} parent=5 // pred_region
        %s143 = ssub.s32 %s16, 1
        // Predicated region
        $region13: #{tpu_custom_call.1} parent=11 // pred_check
          %p144 = pneg %p82
        $region14: #{tpu_custom_call.1} parent=11 // pred_check_branch
          %146 = sbr.rel (%p144) target = $region16
        $region15: #{tpu_custom_call.1} parent=11 // pred_region
          %s147 = smul.u32 32, %s26
          %149 = vsyncadd [#allocation7], 0
          %s150 = smul.addr %s147, 4
          %s151 = scalar_lea.hbm %s1, %s150
          %s152 = sshll.u32 %s151, 4
          %s153 = int_to_ptr.hbm [resolvable:$true] %s152
          %s154 = sshll.u32 [#allocation6], 4
          %s155 = int_to_ptr.vmem [resolvable:$true] %s154
          %160 = dma.hbm_to_vmem [thread:$0]  %s153, 2048, %s155, [#allocation7], 64, 64, 4
        $region16: #{tpu_custom_call.1} parent=11 // pred_fallthru
          _
        // Predicated region
        $region17: #{tpu_custom_call.1} parent=11 // pred_check
          %p161 = pneg %p103
        $region18: #{tpu_custom_call.1} parent=11 // pred_check_branch
          %163 = sbr.rel (%p161) target = $region20
        $region19: #{tpu_custom_call.1} parent=11 // pred_region
          %165 = vsyncadd [#allocation7], 0
          %s166 = sshll.u32 %s2, 4
          %s167 = int_to_ptr.hbm [resolvable:$true] %s166
          %s168 = sshll.u32 [#allocation8], 4
          %s169 = int_to_ptr.vmem [resolvable:$true] %s168
          %174 = dma.hbm_to_vmem [thread:$0]  %s167, 2048, %s169, [#allocation7], 128, 128, 8
        $region20: #{tpu_custom_call.1} parent=11 // pred_fallthru
          _
      $region12: #{tpu_custom_call.1} parent=5 // pred_fallthru
        _
      %p175 = scmp.lt.s32.totalorder %s16, 2
      // Predicated region
      $region21: #{tpu_custom_call.1} parent=5 // pred_check
        %p176 = pneg %p175
      $region22: #{tpu_custom_call.1} parent=5 // pred_check_branch
        %178 = sbr.rel (%p176) target = $region24
      $region23: #{tpu_custom_call.1} parent=5 // pred_region
        // Predicated region
        $region25: #{tpu_custom_call.1} parent=23 // pred_check
          %p179 = pneg %p50
        $region26: #{tpu_custom_call.1} parent=23 // pred_check_branch
          %181 = sbr.rel (%p179) target = $region28
        $region27: #{tpu_custom_call.1} parent=23 // pred_region
          %s182 = sand.u32 %s40, 1
          %s183 = scalar_lea.sflag [#allocation4], %s182
          %s184 = sand.u32 %s40, 1
          %s185 = smul.addr %s184, 128
          %s186 = scalar_lea.vmem [#allocation3], %s185
          %s187 = smul.u32 16, %s23
          %s188 = smul.u32 2, %s24
          %190 = vsyncadd %s183, 0
          %s191 = smul.addr %s187, 2
          %s192 = sadd.s32 %s188, %s191
          %s193 = smul.addr %s192, 4
          %s194 = scalar_lea.hbm %s0, %s193
          %s195 = sshll.u32 %s194, 4
          %s196 = int_to_ptr.hbm [resolvable:$true] %s195
          %s197 = sshll.u32 %s186, 4
          %s198 = int_to_ptr.vmem [resolvable:$true] %s197
          %203 = dma.hbm_to_vmem [thread:$0]  %s196, 2048, %s198, %s183, 128, 128, 8
        $region28: #{tpu_custom_call.1} parent=23 // pred_fallthru
          _
      $region24: #{tpu_custom_call.1} parent=5 // pred_fallthru
        _
      %p204 = scmp.le.s32.totalorder 1, %s16
      %p205 = scmp.lt.s32.totalorder %s16, 3
      %p206 = pnand %p204, %p205
      %p207 = pneg %p206
      // Predicated region
      $region29: #{tpu_custom_call.1} parent=5 // pred_check
        _
      $region30: #{tpu_custom_call.1} parent=5 // pred_check_branch
        %209 = sbr.rel (%p206) target = $region32
      $region31: #{tpu_custom_call.1} parent=5 // pred_region
        %s210 = ssub.s32 %s16, 1
        %s211 = sand.u32 %s43, 1
        %s212 = scalar_lea.sflag [#allocation4], %s211
        %s213 = sand.u32 %s43, 1
        %s214 = smul.addr %s213, 128
        %s215 = scalar_lea.vmem [#allocation3], %s214
        // Predicated region
        $region33: #{tpu_custom_call.1} parent=31 // pred_check
          %p216 = pneg %p56
        $region34: #{tpu_custom_call.1} parent=31 // pred_check_branch
          %218 = sbr.rel (%p216) target = $region36
        $region35: #{tpu_custom_call.1} parent=31 // pred_region
          %220 = dma.done %s212, 2048
        $region36: #{tpu_custom_call.1} parent=31 // pred_fallthru
          _
        // Predicated region
        $region37: #{tpu_custom_call.1} parent=31 // pred_check
          %p221 = pneg %p82
        $region38: #{tpu_custom_call.1} parent=31 // pred_check_branch
          %223 = sbr.rel (%p221) target = $region40
        $region39: #{tpu_custom_call.1} parent=31 // pred_region
          %225 = dma.done [#allocation7], 2048
        $region40: #{tpu_custom_call.1} parent=31 // pred_fallthru
          _
        // Predicated region
        $region41: #{tpu_custom_call.1} parent=31 // pred_check
          %p226 = pneg %p103
        $region42: #{tpu_custom_call.1} parent=31 // pred_check_branch
          %228 = sbr.rel (%p226) target = $region44
        $region43: #{tpu_custom_call.1} parent=31 // pred_region
          %230 = dma.done [#allocation7], 2048
        $region44: #{tpu_custom_call.1} parent=31 // pred_fallthru
          _
        %s231 = sand.u32 %s43, 1
        %s232 = scalar_lea.sflag [#allocation4], %s231
        %s233 = sand.u32 %s43, 1
        %s234 = smul.addr %s233, 128
        %s235 = scalar_lea.vmem [#allocation3], %s234
        %p236 = pneg %p56
        %p237 = pneg %p53
        %p238 = pneg %p82
        %p239 = pneg %p79
        %p240 = pneg %p103
        %p241 = pneg %p100
        %p242 = pneg %p129
        %p243 = pneg %p126
        %s244 = sand.u32 %s116, 1
        %s245 = scalar_lea.sflag [#allocation5], %s244
        %s246 = sand.u32 %s116, 1
        %s247 = smul.addr %s246, 128
        %s248 = scalar_lea.vmem [#allocation9], %s247
        %s249 = smul.u32 16, %s25
        %s250 = smul.u32 2, %s26
        %s251 = smul.u32 32, %s26
        %s252 = smul.u32 16, %s25
        %p253 = scmp.eq.s32.totalorder %s26, 0
        // Predicated region
        $region45: #{tpu_custom_call.1} parent=31 // pred_check
          %p254 = pneg %p253
        $region46: #{tpu_custom_call.1} parent=31 // pred_check_branch
          %256 = sbr.rel (%p254) target = $region48
        $region47: #{tpu_custom_call.1} parent=31 // pred_region
          %257 = vst [vmem:[#allocation2] sm:$0xff] 0.0
          %258 = vst [vmem:[#allocation2 + $0x8] sm:$0xff] 0.0
          %259 = vst [vmem:[#allocation2 + $0x10] sm:$0xff] 0.0
          %260 = vst [vmem:[#allocation2 + $0x18] sm:$0xff] 0.0
          %261 = vst [vmem:[#allocation2 + $0x20] sm:$0xff] 0.0
          %262 = vst [vmem:[#allocation2 + $0x28] sm:$0xff] 0.0
          %263 = vst [vmem:[#allocation2 + $0x30] sm:$0xff] 0.0
          %264 = vst [vmem:[#allocation2 + $0x38] sm:$0xff] 0.0
          %265 = vst [vmem:[#allocation2 + $0x40] sm:$0xff] 0.0
          %266 = vst [vmem:[#allocation2 + $0x48] sm:$0xff] 0.0
          %267 = vst [vmem:[#allocation2 + $0x50] sm:$0xff] 0.0
          %268 = vst [vmem:[#allocation2 + $0x58] sm:$0xff] 0.0
          %269 = vst [vmem:[#allocation2 + $0x60] sm:$0xff] 0.0
          %270 = vst [vmem:[#allocation2 + $0x68] sm:$0xff] 0.0
          %271 = vst [vmem:[#allocation2 + $0x70] sm:$0xff] 0.0
          %272 = vst [vmem:[#allocation2 + $0x78] sm:$0xff] 0.0
        $region48: #{tpu_custom_call.1} parent=31 // pred_fallthru
          _
        %v273 = vld [vmem:[#allocation2] sm:$0xff]
        %v274 = vld [vmem:[#allocation2 + $0x8] sm:$0xff]
        %v275 = vld [vmem:[#allocation2 + $0x10] sm:$0xff]
        %v276 = vld [vmem:[#allocation2 + $0x18] sm:$0xff]
        %v277 = vld [vmem:[#allocation2 + $0x20] sm:$0xff]
        %v278 = vld [vmem:[#allocation2 + $0x28] sm:$0xff]
        %v279 = vld [vmem:[#allocation2 + $0x30] sm:$0xff]
        %v280 = vld [vmem:[#allocation2 + $0x38] sm:$0xff]
        %v281 = vld [vmem:[#allocation2 + $0x40] sm:$0xff]
        %v282 = vld [vmem:[#allocation2 + $0x48] sm:$0xff]
        %v283 = vld [vmem:[#allocation2 + $0x50] sm:$0xff]
        %v284 = vld [vmem:[#allocation2 + $0x58] sm:$0xff]
        %v285 = vld [vmem:[#allocation2 + $0x60] sm:$0xff]
        %v286 = vld [vmem:[#allocation2 + $0x68] sm:$0xff]
        %v287 = vld [vmem:[#allocation2 + $0x70] sm:$0xff]
        %v288 = vld [vmem:[#allocation2 + $0x78] sm:$0xff]
        %v289 = vld [vmem:[%s215] sm:$0xff]
        %v290 = vld [vmem:[%s215 + $0x8] sm:$0xff]
        %v291 = vld [vmem:[%s215 + $0x10] sm:$0xff]
        %v292 = vld [vmem:[%s215 + $0x18] sm:$0xff]
        %v293 = vld [vmem:[%s215 + $0x20] sm:$0xff]
        %v294 = vld [vmem:[%s215 + $0x28] sm:$0xff]
        %v295 = vld [vmem:[%s215 + $0x30] sm:$0xff]
        %v296 = vld [vmem:[%s215 + $0x38] sm:$0xff]
        %v297 = vld [vmem:[%s215 + $0x40] sm:$0xff]
        %v298 = vld [vmem:[%s215 + $0x48] sm:$0xff]
        %v299 = vld [vmem:[%s215 + $0x50] sm:$0xff]
        %v300 = vld [vmem:[%s215 + $0x58] sm:$0xff]
        %v301 = vld [vmem:[%s215 + $0x60] sm:$0xff]
        %v302 = vld [vmem:[%s215 + $0x68] sm:$0xff]
        %v303 = vld [vmem:[%s215 + $0x70] sm:$0xff]
        %v304 = vld [vmem:[%s215 + $0x78] sm:$0xff]
        %v305 = vld [vmem:[#allocation6] sm:$0xf]
        %v306 = vld [vmem:[#allocation6 + $0x4] sm:$0xf]
        %v307 = vld [vmem:[#allocation6 + $0x8] sm:$0xf]
        %v308 = vld [vmem:[#allocation6 + $0xc] sm:$0xf]
        %v309 = vld [vmem:[#allocation6 + $0x10] sm:$0xf]
        %v310 = vld [vmem:[#allocation6 + $0x14] sm:$0xf]
        %v311 = vld [vmem:[#allocation6 + $0x18] sm:$0xf]
        %v312 = vld [vmem:[#allocation6 + $0x1c] sm:$0xf]
        %v313 = vld [vmem:[#allocation6 + $0x20] sm:$0xf]
        %v314 = vld [vmem:[#allocation6 + $0x24] sm:$0xf]
        %v315 = vld [vmem:[#allocation6 + $0x28] sm:$0xf]
        %v316 = vld [vmem:[#allocation6 + $0x2c] sm:$0xf]
        %v317 = vld [vmem:[#allocation6 + $0x30] sm:$0xf]
        %v318 = vld [vmem:[#allocation6 + $0x34] sm:$0xf]
        %v319 = vld [vmem:[#allocation6 + $0x38] sm:$0xf]
        %v320 = vld [vmem:[#allocation6 + $0x3c] sm:$0xf]
        %v321 = vld [vmem:[#allocation6 + $0x40] sm:$0xf]
        %v322 = vld [vmem:[#allocation6 + $0x44] sm:$0xf]
        %v323 = vld [vmem:[#allocation6 + $0x48] sm:$0xf]
        %v324 = vld [vmem:[#allocation6 + $0x4c] sm:$0xf]
        %v325 = vld [vmem:[#allocation6 + $0x50] sm:$0xf]
        %v326 = vld [vmem:[#allocation6 + $0x54] sm:$0xf]
        %v327 = vld [vmem:[#allocation6 + $0x58] sm:$0xf]
        %v328 = vld [vmem:[#allocation6 + $0x5c] sm:$0xf]
        %v329 = vld [vmem:[#allocation6 + $0x60] sm:$0xf]
        %v330 = vld [vmem:[#allocation6 + $0x64] sm:$0xf]
        %v331 = vld [vmem:[#allocation6 + $0x68] sm:$0xf]
        %v332 = vld [vmem:[#allocation6 + $0x6c] sm:$0xf]
        %v333 = vld [vmem:[#allocation6 + $0x70] sm:$0xf]
        %v334 = vld [vmem:[#allocation6 + $0x74] sm:$0xf]
        %v335 = vld [vmem:[#allocation6 + $0x78] sm:$0xf]
        %v336 = vld [vmem:[#allocation6 + $0x7c] sm:$0xf]
        %v353 = vunpack.c.l.b16 %v289
        %v354 = vunpack.c.h.b16 %v289
        %v355 = vunpack.c.l.b16 %v290
        %v356 = vunpack.c.h.b16 %v290
        %v357 = vunpack.c.l.b16 %v291
        %v358 = vunpack.c.h.b16 %v291
        %v359 = vunpack.c.l.b16 %v292
        %v360 = vunpack.c.h.b16 %v292
        %v361 = vunpack.c.l.b16 %v293
        %v362 = vunpack.c.h.b16 %v293
        %v363 = vunpack.c.l.b16 %v294
        %v364 = vunpack.c.h.b16 %v294
        %v365 = vunpack.c.l.b16 %v295
        %v366 = vunpack.c.h.b16 %v295
        %v367 = vunpack.c.l.b16 %v296
        %v368 = vunpack.c.h.b16 %v296
        %v369 = vunpack.c.l.b16 %v297
        %v370 = vunpack.c.h.b16 %v297
        %v371 = vunpack.c.l.b16 %v298
        %v372 = vunpack.c.h.b16 %v298
        %v373 = vunpack.c.l.b16 %v299
        %v374 = vunpack.c.h.b16 %v299
        %v375 = vunpack.c.l.b16 %v300
        %v376 = vunpack.c.h.b16 %v300
        %v377 = vunpack.c.l.b16 %v301
        %v378 = vunpack.c.h.b16 %v301
        %v379 = vunpack.c.l.b16 %v302
        %v380 = vunpack.c.h.b16 %v302
        %v381 = vunpack.c.l.b16 %v303
        %v382 = vunpack.c.h.b16 %v303
        %v383 = vunpack.c.l.b16 %v304
        %v384 = vunpack.c.h.b16 %v304
        %v385 = vpack.c.b16 %v355, %v353
        %v386 = vpack.c.b16 %v356, %v354
        %v387 = vpack.c.b16 %v359, %v357
        %v388 = vpack.c.b16 %v360, %v358
        %v389 = vpack.c.b16 %v363, %v361
        %v390 = vpack.c.b16 %v364, %v362
        %v391 = vpack.c.b16 %v367, %v365
        %v392 = vpack.c.b16 %v368, %v366
        %v393 = vpack.c.b16 %v371, %v369
        %v394 = vpack.c.b16 %v372, %v370
        %v395 = vpack.c.b16 %v375, %v373
        %v396 = vpack.c.b16 %v376, %v374
        %v397 = vpack.c.b16 %v379, %v377
        %v398 = vpack.c.b16 %v380, %v378
        %v399 = vpack.c.b16 %v383, %v381
        %v400 = vpack.c.b16 %v384, %v382
        %v449 = vunpack.c.l.b16 %v305
        %v450 = vunpack.c.l.b16 %v306
        %v451 = vunpack.c.l.b16 %v307
        %v452 = vunpack.c.l.b16 %v308
        %v453 = vunpack.c.l.b16 %v309
        %v454 = vunpack.c.l.b16 %v310
        %v455 = vunpack.c.l.b16 %v311
        %v456 = vunpack.c.l.b16 %v312
        %v457 = vunpack.c.l.b16 %v313
        %v458 = vunpack.c.l.b16 %v314
        %v459 = vunpack.c.l.b16 %v315
        %v460 = vunpack.c.l.b16 %v316
        %v461 = vunpack.c.l.b16 %v317
        %v462 = vunpack.c.l.b16 %v318
        %v463 = vunpack.c.l.b16 %v319
        %v464 = vunpack.c.l.b16 %v320
        %v465 = vunpack.c.l.b16 %v321
        %v466 = vunpack.c.l.b16 %v322
        %v467 = vunpack.c.l.b16 %v323
        %v468 = vunpack.c.l.b16 %v324
        %v469 = vunpack.c.l.b16 %v325
        %v470 = vunpack.c.l.b16 %v326
        %v471 = vunpack.c.l.b16 %v327
        %v472 = vunpack.c.l.b16 %v328
        %v473 = vunpack.c.l.b16 %v329
        %v474 = vunpack.c.l.b16 %v330
        %v475 = vunpack.c.l.b16 %v331
        %v476 = vunpack.c.l.b16 %v332
        %v477 = vunpack.c.l.b16 %v333
        %v478 = vunpack.c.l.b16 %v334
        %v479 = vunpack.c.l.b16 %v335
        %v480 = vunpack.c.l.b16 %v336
        %v481 = vpack.c.b16 %v450, %v449
        %v482 = vpack.c.b16 %v452, %v451
        %v483 = vpack.c.b16 %v454, %v453
        %v484 = vpack.c.b16 %v456, %v455
        %v485 = vpack.c.b16 %v458, %v457
        %v486 = vpack.c.b16 %v460, %v459
        %v487 = vpack.c.b16 %v462, %v461
        %v488 = vpack.c.b16 %v464, %v463
        %v489 = vpack.c.b16 %v466, %v465
        %v490 = vpack.c.b16 %v468, %v467
        %v491 = vpack.c.b16 %v470, %v469
        %v492 = vpack.c.b16 %v472, %v471
        %v493 = vpack.c.b16 %v474, %v473
        %v494 = vpack.c.b16 %v476, %v475
        %v495 = vpack.c.b16 %v478, %v477
        %v496 = vpack.c.b16 %v480, %v479
        %513 = vmatpush.bf16.msra.mxu0 %v488
        %514 = vmatpush.bf16.msra.mxu0 %v487
        %515 = vmatpush.bf16.msra.mxu0 %v486
        %516 = vmatpush.bf16.msra.mxu0 %v485
        %517 = vmatpush.bf16.msra.mxu0 %v484
        %518 = vmatpush.bf16.msra.mxu0 %v483
        %519 = vmatpush.bf16.msra.mxu0 %v482
        %520 = vmatpush.bf16.msra.mxu0 %v481
        %521 = vmatmul.bf16.gmra.mxu0 %v385
        %v522 = vpop.f32.mrf.mxu0
        %v523 = vadd.f32 0.0, %v522
        %v524 = vpop.f32.mrf.mxu0
        %v525 = vadd.f32 0.0, %v524
        %526 = vmatmul.bf16.gmra.mxu0 %v387
        %v527 = vpop.f32.mrf.mxu0
        %v528 = vadd.f32 0.0, %v527
        %v529 = vpop.f32.mrf.mxu0
        %v530 = vadd.f32 0.0, %v529
        %531 = vmatmul.bf16.gmra.mxu0 %v389
        %v532 = vpop.f32.mrf.mxu0
        %v533 = vadd.f32 0.0, %v532
        %v534 = vpop.f32.mrf.mxu0
        %v535 = vadd.f32 0.0, %v534
        %536 = vmatmul.bf16.gmra.mxu0 %v391
        %v537 = vpop.f32.mrf.mxu0
        %v538 = vadd.f32 0.0, %v537
        %v539 = vpop.f32.mrf.mxu0
        %v540 = vadd.f32 0.0, %v539
        %541 = vmatmul.bf16.gmra.mxu0 %v393
        %v542 = vpop.f32.mrf.mxu0
        %v543 = vadd.f32 0.0, %v542
        %v544 = vpop.f32.mrf.mxu0
        %v545 = vadd.f32 0.0, %v544
        %546 = vmatmul.bf16.gmra.mxu0 %v395
        %v547 = vpop.f32.mrf.mxu0
        %v548 = vadd.f32 0.0, %v547
        %v549 = vpop.f32.mrf.mxu0
        %v550 = vadd.f32 0.0, %v549
        %551 = vmatmul.bf16.gmra.mxu0 %v397
        %v552 = vpop.f32.mrf.mxu0
        %v553 = vadd.f32 0.0, %v552
        %v554 = vpop.f32.mrf.mxu0
        %v555 = vadd.f32 0.0, %v554
        %556 = vmatmul.bf16.gmra.mxu0 %v399
        %v557 = vpop.f32.mrf.mxu0
        %v558 = vadd.f32 0.0, %v557
        %v559 = vpop.f32.mrf.mxu0
        %v560 = vadd.f32 0.0, %v559
        %561 = vdwg.mxu0
        %562 = vmatpush.bf16.msra.mxu0 %v496
        %563 = vmatpush.bf16.msra.mxu0 %v495
        %564 = vmatpush.bf16.msra.mxu0 %v494
        %565 = vmatpush.bf16.msra.mxu0 %v493
        %566 = vmatpush.bf16.msra.mxu0 %v492
        %567 = vmatpush.bf16.msra.mxu0 %v491
        %568 = vmatpush.bf16.msra.mxu0 %v490
        %569 = vmatpush.bf16.msra.mxu0 %v489
        %570 = vmatmul.bf16.gmra.mxu0 %v386
        %v571 = vpop.f32.mrf.mxu0
        %v572 = vadd.f32 %v523, %v571
        %v573 = vpop.f32.mrf.mxu0
        %v574 = vadd.f32 %v525, %v573
        %575 = vmatmul.bf16.gmra.mxu0 %v388
        %v576 = vpop.f32.mrf.mxu0
        %v577 = vadd.f32 %v528, %v576
        %v578 = vpop.f32.mrf.mxu0
        %v579 = vadd.f32 %v530, %v578
        %580 = vmatmul.bf16.gmra.mxu0 %v390
        %v581 = vpop.f32.mrf.mxu0
        %v582 = vadd.f32 %v533, %v581
        %v583 = vpop.f32.mrf.mxu0
        %v584 = vadd.f32 %v535, %v583
        %585 = vmatmul.bf16.gmra.mxu0 %v392
        %v586 = vpop.f32.mrf.mxu0
        %v587 = vadd.f32 %v538, %v586
        %v588 = vpop.f32.mrf.mxu0
        %v589 = vadd.f32 %v540, %v588
        %590 = vmatmul.bf16.gmra.mxu0 %v394
        %v591 = vpop.f32.mrf.mxu0
        %v592 = vadd.f32 %v543, %v591
        %v593 = vpop.f32.mrf.mxu0
        %v594 = vadd.f32 %v545, %v593
        %595 = vmatmul.bf16.gmra.mxu0 %v396
        %v596 = vpop.f32.mrf.mxu0
        %v597 = vadd.f32 %v548, %v596
        %v598 = vpop.f32.mrf.mxu0
        %v599 = vadd.f32 %v550, %v598
        %600 = vmatmul.bf16.gmra.mxu0 %v398
        %v601 = vpop.f32.mrf.mxu0
        %v602 = vadd.f32 %v553, %v601
        %v603 = vpop.f32.mrf.mxu0
        %v604 = vadd.f32 %v555, %v603
        %605 = vmatmul.bf16.gmra.mxu0 %v400
        %v606 = vpop.f32.mrf.mxu0
        %v607 = vadd.f32 %v558, %v606
        %v608 = vpop.f32.mrf.mxu0
        %v609 = vadd.f32 %v560, %v608
        %610 = vdwg.mxu0
        %v611 = vadd.f32 %v273, %v572
        %v612 = vadd.f32 %v274, %v574
        %v613 = vadd.f32 %v275, %v577
        %v614 = vadd.f32 %v276, %v579
        %v615 = vadd.f32 %v277, %v582
        %v616 = vadd.f32 %v278, %v584
        %v617 = vadd.f32 %v279, %v587
        %v618 = vadd.f32 %v280, %v589
        %v619 = vadd.f32 %v281, %v592
        %v620 = vadd.f32 %v282, %v594
        %v621 = vadd.f32 %v283, %v597
        %v622 = vadd.f32 %v284, %v599
        %v623 = vadd.f32 %v285, %v602
        %v624 = vadd.f32 %v286, %v604
        %v625 = vadd.f32 %v287, %v607
        %v626 = vadd.f32 %v288, %v609
        %627 = vst [vmem:[#allocation2] sm:$0xff] %v611
        %628 = vst [vmem:[#allocation2 + $0x8] sm:$0xff] %v612
        %629 = vst [vmem:[#allocation2 + $0x10] sm:$0xff] %v613
        %630 = vst [vmem:[#allocation2 + $0x18] sm:$0xff] %v614
        %631 = vst [vmem:[#allocation2 + $0x20] sm:$0xff] %v615
        %632 = vst [vmem:[#allocation2 + $0x28] sm:$0xff] %v616
        %633 = vst [vmem:[#allocation2 + $0x30] sm:$0xff] %v617
        %634 = vst [vmem:[#allocation2 + $0x38] sm:$0xff] %v618
        %635 = vst [vmem:[#allocation2 + $0x40] sm:$0xff] %v619
        %636 = vst [vmem:[#allocation2 + $0x48] sm:$0xff] %v620
        %637 = vst [vmem:[#allocation2 + $0x50] sm:$0xff] %v621
        %638 = vst [vmem:[#allocation2 + $0x58] sm:$0xff] %v622
        %639 = vst [vmem:[#allocation2 + $0x60] sm:$0xff] %v623
        %640 = vst [vmem:[#allocation2 + $0x68] sm:$0xff] %v624
        %641 = vst [vmem:[#allocation2 + $0x70] sm:$0xff] %v625
        %642 = vst [vmem:[#allocation2 + $0x78] sm:$0xff] %v626
        // Predicated region
        $region49: #{tpu_custom_call.1} parent=31 // pred_check
          %p643 = pneg %p253
        $region50: #{tpu_custom_call.1} parent=31 // pred_check_branch
          %645 = sbr.rel (%p643) target = $region52
        $region51: #{tpu_custom_call.1} parent=31 // pred_region
          %v646 = vld [vmem:[#allocation2] sm:$0xff]
          %v647 = vld [vmem:[#allocation2 + $0x8] sm:$0xff]
          %v648 = vld [vmem:[#allocation2 + $0x10] sm:$0xff]
          %v649 = vld [vmem:[#allocation2 + $0x18] sm:$0xff]
          %v650 = vld [vmem:[#allocation2 + $0x20] sm:$0xff]
          %v651 = vld [vmem:[#allocation2 + $0x28] sm:$0xff]
          %v652 = vld [vmem:[#allocation2 + $0x30] sm:$0xff]
          %v653 = vld [vmem:[#allocation2 + $0x38] sm:$0xff]
          %v654 = vld [vmem:[#allocation2 + $0x40] sm:$0xff]
          %v655 = vld [vmem:[#allocation2 + $0x48] sm:$0xff]
          %v656 = vld [vmem:[#allocation2 + $0x50] sm:$0xff]
          %v657 = vld [vmem:[#allocation2 + $0x58] sm:$0xff]
          %v658 = vld [vmem:[#allocation2 + $0x60] sm:$0xff]
          %v659 = vld [vmem:[#allocation2 + $0x68] sm:$0xff]
          %v660 = vld [vmem:[#allocation2 + $0x70] sm:$0xff]
          %v661 = vld [vmem:[#allocation2 + $0x78] sm:$0xff]
          %v662 = vld [vmem:[#allocation8] sm:$0xff]
          %v663 = vld [vmem:[#allocation8 + $0x8] sm:$0xff]
          %v664 = vld [vmem:[#allocation8 + $0x10] sm:$0xff]
          %v665 = vld [vmem:[#allocation8 + $0x18] sm:$0xff]
          %v666 = vld [vmem:[#allocation8 + $0x20] sm:$0xff]
          %v667 = vld [vmem:[#allocation8 + $0x28] sm:$0xff]
          %v668 = vld [vmem:[#allocation8 + $0x30] sm:$0xff]
          %v669 = vld [vmem:[#allocation8 + $0x38] sm:$0xff]
          %v670 = vld [vmem:[#allocation8 + $0x40] sm:$0xff]
          %v671 = vld [vmem:[#allocation8 + $0x48] sm:$0xff]
          %v672 = vld [vmem:[#allocation8 + $0x50] sm:$0xff]
          %v673 = vld [vmem:[#allocation8 + $0x58] sm:$0xff]
          %v674 = vld [vmem:[#allocation8 + $0x60] sm:$0xff]
          %v675 = vld [vmem:[#allocation8 + $0x68] sm:$0xff]
          %v676 = vld [vmem:[#allocation8 + $0x70] sm:$0xff]
          %v677 = vld [vmem:[#allocation8 + $0x78] sm:$0xff]
          %678 = vmatpush.xpose.msra.mxu0 %v677
          %679 = vmatpush.xpose.msra.mxu0 %v676
          %680 = vmatpush.xpose.msra.mxu0 %v675
          %681 = vmatpush.xpose.msra.mxu0 %v674
          %682 = vmatpush.xpose.msra.mxu0 %v673
          %683 = vmatpush.xpose.msra.mxu0 %v672
          %684 = vmatpush.xpose.msra.mxu0 %v671
          %685 = vmatpush.xpose.msra.mxu0 %v670
          %686 = vmatpush.xpose.msra.mxu0 %v669
          %687 = vmatpush.xpose.msra.mxu0 %v668
          %688 = vmatpush.xpose.msra.mxu0 %v667
          %689 = vmatpush.xpose.msra.mxu0 %v666
          %690 = vmatpush.xpose.msra.mxu0 %v665
          %691 = vmatpush.xpose.msra.mxu0 %v664
          %692 = vmatpush.xpose.msra.mxu0 %v663
          %693 = vmatpush.xpose.msra.mxu0 %v662
          %694 = vmatmul.f32.gmra.mxu0 %v646
          %v695 = vpop.f32.mrf.mxu0
          %v696 = vadd.f32 0.0, %v695
          %697 = vmatmul.f32.gmra.mxu0 %v647
          %v698 = vpop.f32.mrf.mxu0
          %v699 = vadd.f32 0.0, %v698
          %700 = vmatmul.f32.gmra.mxu0 %v648
          %v701 = vpop.f32.mrf.mxu0
          %v702 = vadd.f32 0.0, %v701
          %703 = vmatmul.f32.gmra.mxu0 %v649
          %v704 = vpop.f32.mrf.mxu0
          %v705 = vadd.f32 0.0, %v704
          %706 = vmatmul.f32.gmra.mxu0 %v650
          %v707 = vpop.f32.mrf.mxu0
          %v708 = vadd.f32 0.0, %v707
          %709 = vmatmul.f32.gmra.mxu0 %v651
          %v710 = vpop.f32.mrf.mxu0
          %v711 = vadd.f32 0.0, %v710
          %712 = vmatmul.f32.gmra.mxu0 %v652
          %v713 = vpop.f32.mrf.mxu0
          %v714 = vadd.f32 0.0, %v713
          %715 = vmatmul.f32.gmra.mxu0 %v653
          %v716 = vpop.f32.mrf.mxu0
          %v717 = vadd.f32 0.0, %v716
          %718 = vmatmul.f32.gmra.mxu0 %v654
          %v719 = vpop.f32.mrf.mxu0
          %v720 = vadd.f32 0.0, %v719
          %721 = vmatmul.f32.gmra.mxu0 %v655
          %v722 = vpop.f32.mrf.mxu0
          %v723 = vadd.f32 0.0, %v722
          %724 = vmatmul.f32.gmra.mxu0 %v656
          %v725 = vpop.f32.mrf.mxu0
          %v726 = vadd.f32 0.0, %v725
          %727 = vmatmul.f32.gmra.mxu0 %v657
          %v728 = vpop.f32.mrf.mxu0
          %v729 = vadd.f32 0.0, %v728
          %730 = vmatmul.f32.gmra.mxu0 %v658
          %v731 = vpop.f32.mrf.mxu0
          %v732 = vadd.f32 0.0, %v731
          %733 = vmatmul.f32.gmra.mxu0 %v659
          %v734 = vpop.f32.mrf.mxu0
          %v735 = vadd.f32 0.0, %v734
          %736 = vmatmul.f32.gmra.mxu0 %v660
          %v737 = vpop.f32.mrf.mxu0
          %v738 = vadd.f32 0.0, %v737
          %739 = vmatmul.f32.gmra.mxu0 %v661
          %v740 = vpop.f32.mrf.mxu0
          %v741 = vadd.f32 0.0, %v740
          %742 = vdwg.mxu0
          %743 = vst [vmem:[%s248] sm:$0xff] %v696
          %744 = vst [vmem:[%s248 + $0x8] sm:$0xff] %v699
          %745 = vst [vmem:[%s248 + $0x10] sm:$0xff] %v702
          %746 = vst [vmem:[%s248 + $0x18] sm:$0xff] %v705
          %747 = vst [vmem:[%s248 + $0x20] sm:$0xff] %v708
          %748 = vst [vmem:[%s248 + $0x28] sm:$0xff] %v711
          %749 = vst [vmem:[%s248 + $0x30] sm:$0xff] %v714
          %750 = vst [vmem:[%s248 + $0x38] sm:$0xff] %v717
          %751 = vst [vmem:[%s248 + $0x40] sm:$0xff] %v720
          %752 = vst [vmem:[%s248 + $0x48] sm:$0xff] %v723
          %753 = vst [vmem:[%s248 + $0x50] sm:$0xff] %v726
          %754 = vst [vmem:[%s248 + $0x58] sm:$0xff] %v729
          %755 = vst [vmem:[%s248 + $0x60] sm:$0xff] %v732
          %756 = vst [vmem:[%s248 + $0x68] sm:$0xff] %v735
          %757 = vst [vmem:[%s248 + $0x70] sm:$0xff] %v738
          %758 = vst [vmem:[%s248 + $0x78] sm:$0xff] %v741
        $region52: #{tpu_custom_call.1} parent=31 // pred_fallthru
          _
        %s759 = sand.u32 %s116, 1
        %s760 = scalar_lea.sflag [#allocation5], %s759
        %s761 = sand.u32 %s116, 1
        %s762 = smul.addr %s761, 128
        %s763 = scalar_lea.vmem [#allocation9], %s762
        // Predicated region
        $region53: #{tpu_custom_call.1} parent=31 // pred_check
          %p764 = pneg %p126
        $region54: #{tpu_custom_call.1} parent=31 // pred_check_branch
          %766 = sbr.rel (%p764) target = $region56
        $region55: #{tpu_custom_call.1} parent=31 // pred_region
          %s767 = smul.u32 16, %s25
          %769 = vsyncadd %s760, 0
          %s770 = smul.addr %s767, 8
          %s771 = scalar_lea.hbm %s3, %s770
          %s772 = sshll.u32 %s763, 4
          %s773 = int_to_ptr.vmem [resolvable:$true] %s772
          %s774 = sshll.u32 %s771, 4
          %s775 = int_to_ptr.hbm [resolvable:$true] %s774
          %780 = dma.vmem_to_hbm [thread:$0]  %s773, 2048, %s775, %s760, 128, 128, 8
        $region56: #{tpu_custom_call.1} parent=31 // pred_fallthru
          _
      $region32: #{tpu_custom_call.1} parent=5 // pred_fallthru
        _
      %p781 = scmp.le.s32.totalorder 2, %s16
      // Predicated region
      $region57: #{tpu_custom_call.1} parent=5 // pred_check
        %p782 = pneg %p781
      $region58: #{tpu_custom_call.1} parent=5 // pred_check_branch
        %784 = sbr.rel (%p782) target = $region60
      $region59: #{tpu_custom_call.1} parent=5 // pred_region
        %s785 = ssub.s32 %s16, 2
        // Predicated region
        $region61: #{tpu_custom_call.1} parent=59 // pred_check
          %p786 = pneg %p132
        $region62: #{tpu_custom_call.1} parent=59 // pred_check_branch
          %788 = sbr.rel (%p786) target = $region64
        $region63: #{tpu_custom_call.1} parent=59 // pred_region
          %s789 = sand.u32 %s117, 1
          %s790 = scalar_lea.sflag [#allocation5], %s789
          %s791 = sand.u32 %s117, 1
          %s792 = smul.addr %s791, 128
          %s793 = scalar_lea.vmem [#allocation9], %s792
          %795 = dma.done %s790, 2048
        $region64: #{tpu_custom_call.1} parent=59 // pred_fallthru
          _
      $region60: #{tpu_custom_call.1} parent=5 // pred_fallthru
        _
    $region6: #{tpu_custom_call.1} parent=1 // loop_footer
      %s20 = sadd.s32 1, %s16
    $region7: #{tpu_custom_call.1} parent=1 // loop_footer_branch
      %15 = sbr.rel target = $region3
    $region8: #{tpu_custom_call.1} parent=1 // loop_exit
      _
    %796 = vsyncpa [#allocation4], 1
    %s797 = scalar_lea.sflag [#allocation4], 1
    %798 = vsyncpa %s797, 1
    %799 = vsyncpa [#allocation7], 1
    %800 = vsyncpa [#allocation5], 1
    %s801 = scalar_lea.sflag [#allocation5], 1
    %802 = vsyncpa %s801, 1

</llo_original>
